<compile_context>
chip_gen: v5e
topology: v5e:2x2
jax: 0.10.0
libtpu: 0.0.40
codegen_flags: <defaults>
</compile_context>

<pallas_src>
import math

import jax
import jax.numpy as jnp
from jax.experimental import pallas as pl
from jax.experimental.pallas import tpu as pltpu


# ---------------------------------------------------------------------------
# Stage 1: causal Toeplitz convolution + D-skip + exact GELU
# grid = (H, B_tiles, n_tri) with n_tri = nL*(nL+1)/2 triangular (li, ki) steps
# ---------------------------------------------------------------------------
def s4d_conv_kernel(li_ref, ki_ref, u_ref, t_ref, d_ref, y_ref, acc_ref):
    # li_ref/ki_ref : (n_tri,) i32 SMEM  scalar-prefetched (li, ki) schedule
    # u_ref  : (TB, TL) bf16   u[h, b_tile, ki]
    # t_ref  : (TL, TL) bf16   deduped Toeplitz diagonal block d = li - ki
    # d_ref  : (H,)     f32    skip parameter D, in SMEM
    # y_ref  : (TB, TL) bf16   output y[h, b_tile, li]   (stage-1 intermediate)
    # acc_ref: (TB, TL) f32    VMEM accumulator
    h = pl.program_id(0)
    t = pl.program_id(2)
    ki = ki_ref[t]
    li = li_ref[t]

    @pl.when(ki == 0)
    def _init():
        acc_ref[...] = jnp.zeros_like(acc_ref)

    # bf16 MXU operands, f32 accumulation.
    acc_ref[...] += jnp.dot(u_ref[...], t_ref[...],
                            preferred_element_type=jnp.float32)

    @pl.when(ki == li)
    def _finalize():
        # At the diagonal step the u block is exactly u[h, b_tile, li].
        y = acc_ref[...] + u_ref[...].astype(jnp.float32) * d_ref[h]
        # Exact (erf) GELU, matches torch.nn.GELU default; pointwise math in f32.
        y = 0.5 * y * (1.0 + jax.lax.erf(y * jnp.float32(0.7071067811865476)))
        y_ref[...] = y.astype(y_ref.dtype)


# ---------------------------------------------------------------------------
# Stage 2: 1x1 Conv1d (H -> 2H) + bias + GLU, fused with the layout transpose
# input  y : (H, B, L) bf16 block (H, TB2, TL2)
# output o : (B, H, L) f32  block (TB2, H, TL2)   (final module layout)
# ---------------------------------------------------------------------------
def s4d_mix_kernel(y_ref, w_ref, b_ref, o_ref):
    TB2, H, _ = o_ref.shape
    w = w_ref[...]              # (2H, H) bf16
    bias = b_ref[...]           # (2H, 1) f32
    y = y_ref[...]              # (H, TB2, TL2) bf16
    # Small static unroll over the batch tile: each step is a proper 2-D MXU
    # matmul and a lane-dense (H, TL2) store into the (B, H, L) output block.
    for b in range(TB2):
        z = jnp.dot(w, y[:, b, :], preferred_element_type=jnp.float32) + bias
        o_ref[b, :, :] = z[:H, :] * jax.nn.sigmoid(z[H:, :])


# ---------------------------------------------------------------------------
# Plain-JAX glue: SSM kernel generation (complex math) + Toeplitz dedup blocks
# ---------------------------------------------------------------------------
def compute_ssm_kernel(log_dt, C, log_A_real, A_imag, L):
    """Reproduces S4DKernel.forward -> K of shape (H, L), float32."""
    dt = jnp.exp(log_dt)                                      # (H,)
    A = -jnp.exp(log_A_real) + 1j * A_imag                    # (H, N/2) complex
    dtA = A * dt[:, None]                                     # (H, N/2)
    Ct = C * (jnp.exp(dtA) - 1.0) / A                         # (H, N/2)
    Kp = dtA[:, :, None] * jnp.arange(L, dtype=jnp.float32)   # (H, N/2, L)
    K = 2.0 * jnp.real(jnp.einsum('hn,hnl->hl', Ct, jnp.exp(Kp)))
    return K.astype(jnp.float32)


def toeplitz_diag_blocks(K, TL):
    """Deduped causal-Toeplitz diagonal blocks, shape (H, nL, TL, TL).

    blocks[h, d, i, j] = K[h, d*TL + j - i] if d*TL + j - i >= 0 else 0,
    i.e. the (ki, li) block of the full Toeplitz matrix with d = li - ki.
    O(H * L * TL) memory instead of O(H * L^2).
    """
    H, L = K.shape
    nL = L // TL
    i = jnp.arange(TL)[:, None]                               # contraction row
    j = jnp.arange(TL)[None, :]                               # output column
    d = jnp.arange(nL)[:, None, None]
    idx = d * TL + j - i                                      # (nL, TL, TL)
    valid = idx >= 0
    blocks = jnp.where(valid[None], K[:, jnp.clip(idx, 0, L - 1)], 0.0)
    return blocks.astype(jnp.bfloat16)


def _pick_tile(dim, target, quantum):
    """Largest tile <= target that divides dim and is a multiple of `quantum`,
    or the full dimension when dim <= target / no aligned divisor exists.
    TODO(synk): for awkward dims (e.g. prime L) pad to a 128-multiple instead
    of silently falling back to the full dimension."""
    if dim <= target:
        return dim
    t = (target // quantum) * quantum
    while t >= quantum:
        if dim % t == 0:
            return t
        t -= quantum
    return dim


def _vmem_limit(step_bytes):
    # step_bytes already accounts for double buffering; leave slack, cap at
    # 64 MiB so the same setting is safe on v7x's smaller physical VMEM.
    return int(min(max(int(step_bytes * 1.5), 32 * 2**20), 64 * 2**20))


# ---------------------------------------------------------------------------
# Wrapper
# ---------------------------------------------------------------------------
def s4d_forward(u, K, D, W, bias, *, tile_b_target=512, tile_l_target=512):
    # u is (B, H, L) channels-first, same as PyTorch Conv1d (NCL).
    # Tile-target guidance per generation (review): v5e ~512, v7x ~640-768
    # (keep the working set under 64 MiB), v6e ~1280 with a raised vmem limit.
    B, H, L = u.shape

    TB = _pick_tile(B, tile_b_target, 8)     # MXU M tile (batch)
    TL = _pick_tile(L, tile_l_target, 128)   # conv output / contraction tile
    nB, nL = B // TB, L // TL

    # bf16 operands prepared once in the wrapper (cast fused into the
    # transpose by XLA) -> no per-K-step VPU cast inside the kernel.
    u_bf16 = jnp.transpose(u.astype(jnp.float32), (1, 0, 2)).astype(jnp.bfloat16)
    t_blocks = toeplitz_diag_blocks(K, TL)                    # (H, nL, TL, TL) bf16

    # Triangular (li, ki) schedule: only ki <= li steps exist -> no dead steps.
    li_sched = jnp.asarray([li for li in range(nL) for _ in range(li + 1)],
                           dtype=jnp.int32)
    ki_sched = jnp.asarray([ki for li in range(nL) for ki in range(li + 1)],
                           dtype=jnp.int32)
    n_tri = int(li_sched.shape[0])

    step1_bytes = 2 * (TB * TL * 2 + TL * TL * 2 + TB * TL * 2) + TB * TL * 4

    # Stage 1: causal conv + skip + GELU, bf16 intermediate in (H, B, L).
    y_act = pl.pallas_call(
        s4d_conv_kernel,
        out_shape=jax.ShapeDtypeStruct((H, B, L), jnp.bfloat16),
        grid_spec=pltpu.PrefetchScalarGridSpec(
            num_scalar_prefetch=2,
            grid=(H, nB, n_tri),
            in_specs=[
                pl.BlockSpec((None, TB, TL),
                             lambda h, bi, t, li_r, ki_r: (h, bi, ki_r[t])),
                pl.BlockSpec((None, None, TL, TL),
                             lambda h, bi, t, li_r, ki_r:
                             (h, li_r[t] - ki_r[t], 0, 0)),
                pl.BlockSpec(memory_space=pltpu.MemorySpace.SMEM),   # D (H,)
            ],
            out_specs=pl.BlockSpec((None, TB, TL),
                                   lambda h, bi, t, li_r, ki_r: (h, bi, li_r[t])),
            scratch_shapes=[pltpu.VMEM((TB, TL), jnp.float32)],
        ),
        compiler_params=pltpu.CompilerParams(
            dimension_semantics=("parallel", "parallel", "arbitrary"),
            vmem_limit_bytes=_vmem_limit(step1_bytes)),
    )(li_sched, ki_sched, u_bf16, t_blocks, D.astype(jnp.float32))

    # Stage 2: 1x1 conv + GLU + fused layout transpose -> (B, H, L) f32.
    TB2 = _pick_tile(B, 8, 8)                 # small batch tile (static unroll)
    TL2 = _pick_tile(L, 512, 128)             # lane-dense L tile
    nB2, nL2 = B // TB2, L // TL2

    step2_bytes = 2 * (H * TB2 * TL2 * 2 + 2 * H * H * 2 + TB2 * H * TL2 * 4)

    out = pl.pallas_call(
        s4d_mix_kernel,
        out_shape=jax.ShapeDtypeStruct((B, H, L), jnp.float32),
        grid=(nB2, nL2),
        in_specs=[
            pl.BlockSpec((H, TB2, TL2), lambda bi, lt: (0, bi, lt)),
            pl.BlockSpec((2 * H, H),    lambda bi, lt: (0, 0)),
            pl.BlockSpec((2 * H, 1),    lambda bi, lt: (0, 0)),
        ],
        out_specs=pl.BlockSpec((TB2, H, TL2), lambda bi, lt: (bi, 0, lt)),
        compiler_params=pltpu.CompilerParams(
            dimension_semantics=("parallel", "parallel"),
            vmem_limit_bytes=_vmem_limit(step2_bytes)),
    )(y_act,
      W.astype(jnp.bfloat16),
      bias.reshape(2 * H, 1).astype(jnp.float32))

    return out


# ---------------------------------------------------------------------------
# Pure-JAX reference (FFT path, mirrors the PyTorch forward) for validation
# ---------------------------------------------------------------------------
def s4d_reference(u, K, D, W, bias):
    B, H, L = u.shape
    k_f = jnp.fft.rfft(K, n=2 * L)                            # (H, L+1)
    u_f = jnp.fft.rfft(u.astype(jnp.float32), n=2 * L)        # (B, H, L+1)
    y = jnp.fft.irfft(u_f * k_f[None], n=2 * L)[..., :L]
    y = y + u * D[None, :, None]
    y = 0.5 * y * (1.0 + jax.scipy.special.erf(y / jnp.sqrt(2.0)))
    z = jnp.einsum('ch,bhl->bcl', W, y) + bias[None, :, None]
    return z[:, :H] * jax.nn.sigmoid(z[:, H:])


if __name__ == "__main__":
    # Small, deterministic setup: d_model(H)=4, d_state(N)=8, batch=2, seq L=16.
    B, H, N, L = 2, 4, 8, 16
    N2 = N // 2
    key = jax.random.PRNGKey(0)
    k_dt, k_cr, k_ci, k_d, k_w, k_b, k_u = jax.random.split(key, 7)

    dt_min, dt_max = 1e-3, 1e-1
    log_dt = (jax.random.uniform(k_dt, (H,), jnp.float32)
              * (math.log(dt_max) - math.log(dt_min)) + math.log(dt_min))
    C = (jax.random.normal(k_cr, (H, N2), jnp.float32)
         + 1j * jax.random.normal(k_ci, (H, N2), jnp.float32)) / jnp.sqrt(2.0)
    log_A_real = jnp.log(0.5 * jnp.ones((H, N2), jnp.float32))
    A_imag = math.pi * jnp.broadcast_to(jnp.arange(N2, dtype=jnp.float32), (H, N2))
    D = jax.random.normal(k_d, (H,), jnp.float32)
    W = jax.random.normal(k_w, (2 * H, H), jnp.float32) / math.sqrt(H)   # Conv1d(H, 2H, 1) weight
    bias = 0.1 * jax.random.normal(k_b, (2 * H,), jnp.float32)           # Conv1d bias

    u = jax.random.normal(k_u, (B, H, L), jnp.float32)        # input (B, H, L)

    K = compute_ssm_kernel(log_dt, C, log_A_real, A_imag, L)  # (H, L)

    out = jax.jit(s4d_forward)(u, K, D, W, bias)
    out = jax.block_until_ready(out)

    ref = s4d_reference(u, K, D, W, bias)
    assert out.shape == (B, H, L)
    # bf16 MXU operands + bf16 intermediate set the error budget.
    assert bool(jnp.allclose(out, ref, atol=3e-2, rtol=3e-2)), "mismatch vs FFT reference"
    print("KERNEL_OK")
</pallas_src>

<mosaic_0001>
module attributes {stable_mosaic.version = 11 : i64} {
  func.func @s4d_conv_kernel(%arg0: i32, %arg1: i32, %arg2: i32, %arg3: memref<1xi32, #tpu.memory_space<smem>>, %arg4: memref<1xi32, #tpu.memory_space<smem>>, %arg5: memref<1x2x16xbf16, #tpu.memory_space<vmem>>, %arg6: memref<1x1x16x16xbf16, #tpu.memory_space<vmem>>, %arg7: memref<4xf32, #tpu.memory_space<smem>>, %arg8: memref<1x2x16xbf16, #tpu.memory_space<vmem>>, %arg9: memref<2x16xf32, #tpu.memory_space<vmem>>) attributes {dimension_semantics = [#tpu.dimension_semantics<parallel>, #tpu.dimension_semantics<parallel>, #tpu.dimension_semantics<arbitrary>], iteration_bounds = array<i64: 4, 1, 1>, scalar_prefetch = 2 : i64, scratch_operands = 1 : i64, tpu.core_type = #tpu.core_type<tc>, window_params = [{transform_indices = @transform_0, window_bounds = array<i64: 1, 2, 16>}, {transform_indices = @transform_1, window_bounds = array<i64: 1, 1, 16, 16>}, {transform_indices = @transform_2, window_bounds = array<i64: 4>}, {transform_indices = @transform_3, window_bounds = array<i64: 1, 2, 16>}]} {
    %0 = arith.index_cast %arg2 : i32 to index
    %1 = memref.load %arg4[%0] : memref<1xi32, #tpu.memory_space<smem>>
    %2 = arith.index_cast %arg2 : i32 to index
    %3 = memref.load %arg3[%2] : memref<1xi32, #tpu.memory_space<smem>>
    %c0_i32 = arith.constant 0 : i32
    %4 = arith.cmpi eq, %1, %c0_i32 : i32
    %5 = arith.extui %4 : i1 to i32
    %c0_i32_0 = arith.constant 0 : i32
    %6 = arith.cmpi ne, %5, %c0_i32_0 : i32
    scf.if %6 {
      %cst_12 = arith.constant 0.000000e+00 : f32
      %18 = vector.broadcast %cst_12 : f32 to vector<2x16xf32>
      %c0_13 = arith.constant 0 : index
      %c0_14 = arith.constant 0 : index
      %19 = vector.load %arg9[%c0_13, %c0_14] : memref<2x16xf32, #tpu.memory_space<vmem>>, vector<2x16xf32>
      tpu.vector_store %arg9[%c0_13, %c0_14], %18 {strides = array<i32>} : memref<2x16xf32, #tpu.memory_space<vmem>>, vector<2x16xf32>,
    } else {
    }
    %c0 = arith.constant 0 : index
    %c0_1 = arith.constant 0 : index
    %7 = vector.load %arg9[%c0, %c0_1] : memref<2x16xf32, #tpu.memory_space<vmem>>, vector<2x16xf32>
    %c0_2 = arith.constant 0 : index
    %c0_3 = arith.constant 0 : index
    %c0_4 = arith.constant 0 : index
    %8 = vector.load %arg5[%c0_2, %c0_3, %c0_4] : memref<1x2x16xbf16, #tpu.memory_space<vmem>>, vector<1x2x16xbf16>
    %9 = vector.shape_cast %8 : vector<1x2x16xbf16> to vector<2x16xbf16>
    %c0_5 = arith.constant 0 : index
    %c0_6 = arith.constant 0 : index
    %c0_7 = arith.constant 0 : index
    %c0_8 = arith.constant 0 : index
    %10 = vector.load %arg6[%c0_5, %c0_6, %c0_7, %c0_8] : memref<1x1x16x16xbf16, #tpu.memory_space<vmem>>, vector<1x1x16x16xbf16>
    %11 = vector.shape_cast %10 : vector<1x1x16x16xbf16> to vector<16x16xbf16>
    %cst = arith.constant dense<0.000000e+00> : vector<2x16xf32>
    %12 = tpu.matmul %9, %11, %cst {dimension_numbers = #tpu.dot_dimension_numbers<[1], [0], [0], [1], [0, 0, 1, 1], [], []>} : vector<2x16xbf16>, vector<16x16xbf16>, vector<2x16xf32> -> vector<2x16xf32>
    %13 = arith.addf %7, %12 : vector<2x16xf32>
    %c0_9 = arith.constant 0 : index
    %c0_10 = arith.constant 0 : index
    %14 = vector.load %arg9[%c0_9, %c0_10] : memref<2x16xf32, #tpu.memory_space<vmem>>, vector<2x16xf32>
    tpu.vector_store %arg9[%c0_9, %c0_10], %13 {strides = array<i32>} : memref<2x16xf32, #tpu.memory_space<vmem>>, vector<2x16xf32>,
    %15 = arith.cmpi eq, %1, %3 : i32
    %16 = arith.extui %15 : i1 to i32
    %c0_i32_11 = arith.constant 0 : i32
    %17 = arith.cmpi ne, %16, %c0_i32_11 : i32
    scf.if %17 {
      %c0_12 = arith.constant 0 : index
      %c0_13 = arith.constant 0 : index
      %18 = vector.load %arg9[%c0_12, %c0_13] : memref<2x16xf32, #tpu.memory_space<vmem>>, vector<2x16xf32>
      %c0_14 = arith.constant 0 : index
      %c0_15 = arith.constant 0 : index
      %c0_16 = arith.constant 0 : index
      %19 = vector.load %arg5[%c0_14, %c0_15, %c0_16] : memref<1x2x16xbf16, #tpu.memory_space<vmem>>, vector<1x2x16xbf16>
      %20 = vector.shape_cast %19 : vector<1x2x16xbf16> to vector<2x16xbf16>
      %21 = arith.extf %20 : vector<2x16xbf16> to vector<2x16xf32>
      %22 = arith.index_cast %arg0 : i32 to index
      %23 = memref.load %arg7[%22] : memref<4xf32, #tpu.memory_space<smem>>
      %24 = vector.broadcast %23 : f32 to vector<2x16xf32>
      %25 = arith.mulf %21, %24 : vector<2x16xf32>
      %26 = arith.addf %18, %25 : vector<2x16xf32>
      %cst_17 = arith.constant 5.000000e-01 : f32
      %27 = vector.broadcast %cst_17 : f32 to vector<2x16xf32>
      %28 = arith.mulf %27, %26 : vector<2x16xf32>
      %cst_18 = arith.constant 0.707106769 : f32
      %29 = vector.broadcast %cst_18 : f32 to vector<2x16xf32>
      %30 = arith.mulf %26, %29 : vector<2x16xf32>
      %31 = math.erf %30 : vector<2x16xf32>
      %cst_19 = arith.constant 1.000000e+00 : f32
      %32 = vector.broadcast %cst_19 : f32 to vector<2x16xf32>
      %33 = arith.addf %32, %31 : vector<2x16xf32>
      %34 = arith.mulf %28, %33 : vector<2x16xf32>
      %35 = arith.truncf %34 : vector<2x16xf32> to vector<2x16xbf16>
      %c0_20 = arith.constant 0 : index
      %c0_21 = arith.constant 0 : index
      %c0_22 = arith.constant 0 : index
      %36 = vector.load %arg8[%c0_20, %c0_21, %c0_22] : memref<1x2x16xbf16, #tpu.memory_space<vmem>>, vector<1x2x16xbf16>
      %37 = vector.shape_cast %36 : vector<1x2x16xbf16> to vector<2x16xbf16>
      %38 = vector.shape_cast %35 : vector<2x16xbf16> to vector<1x2x16xbf16>
      tpu.vector_store %arg8[%c0_20, %c0_21, %c0_22], %38 {strides = array<i32>} : memref<1x2x16xbf16, #tpu.memory_space<vmem>>, vector<1x2x16xbf16>,
    } else {
    }
    return
  }
  func.func @transform_0(%arg0: i32, %arg1: i32, %arg2: i32, %arg3: memref<1xi32, #tpu.memory_space<smem>>, %arg4: memref<1xi32, #tpu.memory_space<smem>>) -> (i32, i32, i32) {
    %0 = arith.index_cast %arg2 : i32 to index
    %1 = memref.load %arg4[%0] : memref<1xi32, #tpu.memory_space<smem>>
    %c0_i32 = arith.constant 0 : i32
    return %arg0, %arg1, %1 : i32, i32, i32
  }
  func.func @transform_1(%arg0: i32, %arg1: i32, %arg2: i32, %arg3: memref<1xi32, #tpu.memory_space<smem>>, %arg4: memref<1xi32, #tpu.memory_space<smem>>) -> (i32, i32, i32, i32) {
    %0 = arith.index_cast %arg2 : i32 to index
    %1 = memref.load %arg3[%0] : memref<1xi32, #tpu.memory_space<smem>>
    %2 = arith.index_cast %arg2 : i32 to index
    %3 = memref.load %arg4[%2] : memref<1xi32, #tpu.memory_space<smem>>
    %4 = arith.subi %1, %3 : i32
    %c0_i32 = arith.constant 0 : i32
    %c0_i32_0 = arith.constant 0 : i32
    %c0_i32_1 = arith.constant 0 : i32
    return %arg0, %4, %c0_i32, %c0_i32_0 : i32, i32, i32, i32
  }
  func.func @transform_2(%arg0: i32, %arg1: i32, %arg2: i32, %arg3: memref<1xi32, #tpu.memory_space<smem>>, %arg4: memref<1xi32, #tpu.memory_space<smem>>) -> i32 {
    %c0_i32 = arith.constant 0 : i32
    %c0_i32_0 = arith.constant 0 : i32
    return %c0_i32 : i32
  }
  func.func @transform_3(%arg0: i32, %arg1: i32, %arg2: i32, %arg3: memref<1xi32, #tpu.memory_space<smem>>, %arg4: memref<1xi32, #tpu.memory_space<smem>>) -> (i32, i32, i32) {
    %0 = arith.index_cast %arg2 : i32 to index
    %1 = memref.load %arg3[%0] : memref<1xi32, #tpu.memory_space<smem>>
    %c0_i32 = arith.constant 0 : i32
    return %arg0, %arg1, %1 : i32, i32, i32
  }
}

module attributes {stable_mosaic.version = 11 : i64} {
  func.func @s4d_mix_kernel(%arg0: i32, %arg1: i32, %arg2: memref<4x2x16xbf16, #tpu.memory_space<vmem>>, %arg3: memref<8x4xbf16, #tpu.memory_space<vmem>>, %arg4: memref<8x1xf32, #tpu.memory_space<vmem>>, %arg5: memref<2x4x16xf32, #tpu.memory_space<vmem>>) attributes {dimension_semantics = [#tpu.dimension_semantics<parallel>, #tpu.dimension_semantics<parallel>], iteration_bounds = array<i64: 1, 1>, scalar_prefetch = 0 : i64, scratch_operands = 0 : i64, tpu.core_type = #tpu.core_type<tc>, window_params = [{transform_indices = @transform_0, window_bounds = array<i64: 4, 2, 16>}, {pipeline_mode = #tpu.pipeline_mode<synchronous>, transform_indices = @transform_1, window_bounds = array<i64: 8, 4>}, {pipeline_mode = #tpu.pipeline_mode<synchronous>, transform_indices = @transform_2, window_bounds = array<i64: 8, 1>}, {transform_indices = @transform_3, window_bounds = array<i64: 2, 4, 16>}]} {
    %c0 = arith.constant 0 : index
    %c0_0 = arith.constant 0 : index
    %0 = vector.load %arg3[%c0, %c0_0] : memref<8x4xbf16, #tpu.memory_space<vmem>>, vector<8x4xbf16>
    %c0_1 = arith.constant 0 : index
    %c0_2 = arith.constant 0 : index
    %1 = vector.load %arg4[%c0_1, %c0_2] : memref<8x1xf32, #tpu.memory_space<vmem>>, vector<8x1xf32>
    %c0_3 = arith.constant 0 : index
    %c0_4 = arith.constant 0 : index
    %c0_5 = arith.constant 0 : index
    %2 = vector.load %arg2[%c0_3, %c0_4, %c0_5] : memref<4x2x16xbf16, #tpu.memory_space<vmem>>, vector<4x2x16xbf16>
    %3 = vector.extract_strided_slice %2 {offsets = [0, 0, 0], sizes = [4, 1, 16], strides = [1, 1, 1]} : vector<4x2x16xbf16> to vector<4x1x16xbf16>
    %4 = vector.shape_cast %3 : vector<4x1x16xbf16> to vector<4x16xbf16>
    %cst = arith.constant dense<0.000000e+00> : vector<8x16xf32>
    %5 = tpu.matmul %0, %4, %cst {dimension_numbers = #tpu.dot_dimension_numbers<[1], [0], [0], [1], [0, 0, 1, 1], [], []>} : vector<8x4xbf16>, vector<4x16xbf16>, vector<8x16xf32> -> vector<8x16xf32>
    %6 = vector.broadcast %1 : vector<8x1xf32> to vector<8x16xf32>
    %7 = arith.addf %5, %6 : vector<8x16xf32>
    %8 = vector.extract_strided_slice %7 {offsets = [0, 0], sizes = [4, 16], strides = [1, 1]} : vector<8x16xf32> to vector<4x16xf32>
    %9 = vector.extract_strided_slice %7 {offsets = [4, 0], sizes = [4, 16], strides = [1, 1]} : vector<8x16xf32> to vector<4x16xf32>
    %10 = arith.negf %9 : vector<4x16xf32>
    %11 = math.exp %10 : vector<4x16xf32>
    %cst_6 = arith.constant 1.000000e+00 : f32
    %12 = vector.broadcast %cst_6 : f32 to vector<4x16xf32>
    %13 = arith.addf %12, %11 : vector<4x16xf32>
    %14 = arith.divf %12, %13 : vector<4x16xf32>
    %15 = arith.mulf %8, %14 : vector<4x16xf32>
    %c0_7 = arith.constant 0 : index
    %c0_8 = arith.constant 0 : index
    %c0_9 = arith.constant 0 : index
    %16 = vector.load %arg5[%c0_7, %c0_8, %c0_9] : memref<2x4x16xf32, #tpu.memory_space<vmem>>, vector<1x4x16xf32>
    %17 = vector.shape_cast %16 : vector<1x4x16xf32> to vector<4x16xf32>
    %18 = vector.shape_cast %15 : vector<4x16xf32> to vector<1x4x16xf32>
    tpu.vector_store %arg5[%c0_7, %c0_8, %c0_9], %18 {strides = array<i32>} : memref<2x4x16xf32, #tpu.memory_space<vmem>>, vector<1x4x16xf32>,
    %19 = vector.extract_strided_slice %2 {offsets = [0, 1, 0], sizes = [4, 1, 16], strides = [1, 1, 1]} : vector<4x2x16xbf16> to vector<4x1x16xbf16>
    %20 = vector.shape_cast %19 : vector<4x1x16xbf16> to vector<4x16xbf16>
    %cst_10 = arith.constant dense<0.000000e+00> : vector<8x16xf32>
    %21 = tpu.matmul %0, %20, %cst_10 {dimension_numbers = #tpu.dot_dimension_numbers<[1], [0], [0], [1], [0, 0, 1, 1], [], []>} : vector<8x4xbf16>, vector<4x16xbf16>, vector<8x16xf32> -> vector<8x16xf32>
    %22 = vector.broadcast %1 : vector<8x1xf32> to vector<8x16xf32>
    %23 = arith.addf %21, %22 : vector<8x16xf32>
    %24 = vector.extract_strided_slice %23 {offsets = [0, 0], sizes = [4, 16], strides = [1, 1]} : vector<8x16xf32> to vector<4x16xf32>
    %25 = vector.extract_strided_slice %23 {offsets = [4, 0], sizes = [4, 16], strides = [1, 1]} : vector<8x16xf32> to vector<4x16xf32>
    %26 = arith.negf %25 : vector<4x16xf32>
    %27 = math.exp %26 : vector<4x16xf32>
    %cst_11 = arith.constant 1.000000e+00 : f32
    %28 = vector.broadcast %cst_11 : f32 to vector<4x16xf32>
    %29 = arith.addf %28, %27 : vector<4x16xf32>
    %30 = arith.divf %28, %29 : vector<4x16xf32>
    %31 = arith.mulf %24, %30 : vector<4x16xf32>
    %c1 = arith.constant 1 : index
    %c0_12 = arith.constant 0 : index
    %c0_13 = arith.constant 0 : index
    %32 = vector.load %arg5[%c1, %c0_12, %c0_13] : memref<2x4x16xf32, #tpu.memory_space<vmem>>, vector<1x4x16xf32>
    %33 = vector.shape_cast %32 : vector<1x4x16xf32> to vector<4x16xf32>
    %34 = vector.shape_cast %31 : vector<4x16xf32> to vector<1x4x16xf32>
    tpu.vector_store %arg5[%c1, %c0_12, %c0_13], %34 {strides = array<i32>} : memref<2x4x16xf32, #tpu.memory_space<vmem>>, vector<1x4x16xf32>,
    return
  }
  func.func @transform_0(%arg0: i32, %arg1: i32) -> (i32, i32, i32) {
    %c0_i32 = arith.constant 0 : i32
    %c0_i32_0 = arith.constant 0 : i32
    return %c0_i32, %arg0, %arg1 : i32, i32, i32
  }
  func.func @transform_1(%arg0: i32, %arg1: i32) -> (i32, i32) {
    %c0_i32 = arith.constant 0 : i32
    %c0_i32_0 = arith.constant 0 : i32
    %c0_i32_1 = arith.constant 0 : i32
    return %c0_i32, %c0_i32_0 : i32, i32
  }
  func.func @transform_2(%arg0: i32, %arg1: i32) -> (i32, i32) {
    %c0_i32 = arith.constant 0 : i32
    %c0_i32_0 = arith.constant 0 : i32
    %c0_i32_1 = arith.constant 0 : i32
    return %c0_i32, %c0_i32_0 : i32, i32
  }
  func.func @transform_3(%arg0: i32, %arg1: i32) -> (i32, i32, i32) {
    %c0_i32 = arith.constant 0 : i32
    %c0_i32_0 = arith.constant 0 : i32
    return %arg0, %c0_i32, %arg1 : i32, i32, i32
  }
}

</mosaic_0001>

<llo_original>
// kernel: s4d_forward.3
$region0: #{s4d_forward.3}
  #allocation0 [shape = 'u32[]', space=smem, size = 0x4, offset = 0x4, fixed_abs, tag = 'smem constant byte address 0x4 - core index']
  #allocation1 [shape = 'u32[72,128]{1,0:T(1,128)}', space=vmem, size = 0x9000, scoped, tag = 'internal scratch']
  %s0 = inlined_call_operand.vmem [shape: bf16[4,2,16], index: 0, kind: input, shape index: {}]
  %s1 = inlined_call_operand.vmem [shape: bf16[8,4], index: 1, kind: input, shape index: {}]
  %s2 = inlined_call_operand.vmem [shape: f32[8,1], index: 2, kind: input, shape index: {}]
  %s3 = inlined_call_operand.hbm [shape: f32[2,4,16], index: 3, kind: output, shape index: {}]
  %s4 = sld [smem:[#allocation0]]
  $region22: #{s4d_forward.3} parent=0
    _
  %s6 = ssub.s32 1, %s4
  %s7 = scalar_select 0, %s6, %s4
  $region1: #{s4d_forward.3} parent=0
    #allocation2 [shape = 'u8[4096]{0}', space=vmem, size = 0x1000, scoped, tag = 'output window, operand 0, single buffered']
    #allocation3 [shape = 's32[1]{0}', space=sflag, size = 0x4, scoped, tag = 'scoped memory for s4d_forward.3']
    %8 = vsyncpa [#allocation3], 0
    // Predicated region
    $region2: #{s4d_forward.3} parent=1 // pred_check
      _
    $region3: #{s4d_forward.3} parent=1 // pred_check_branch
      %10 = sbr.rel (0) target = $region5
    $region4: #{s4d_forward.3} parent=1 // pred_region
      _
    $region5: #{s4d_forward.3} parent=1 // pred_fallthru
      _
    // Predicated region
    $region6: #{s4d_forward.3} parent=1 // pred_check
      _
    $region7: #{s4d_forward.3} parent=1 // pred_check_branch
      %12 = sbr.rel (0) target = $region9
    $region8: #{s4d_forward.3} parent=1 // pred_region
      _
    $region9: #{s4d_forward.3} parent=1 // pred_fallthru
      _
    // Predicated region
    $region10: #{s4d_forward.3} parent=1 // pred_check
      _
    $region11: #{s4d_forward.3} parent=1 // pred_check_branch
      %14 = sbr.rel (0) target = $region13
    $region12: #{s4d_forward.3} parent=1 // pred_region
      _
    $region13: #{s4d_forward.3} parent=1 // pred_fallthru
      _
    %v16 = vld [vmem:[%s1] sm:$0xf]
    %v17 = vld [vmem:[%s2] sm:$0xff]
    %v18 = vld [vmem:[%s0] sm:$0x1]
    %v19 = vld [vmem:[%s0 + $0x1] sm:$0x1]
    %v20 = vld [vmem:[%s0 + $0x2] sm:$0x1]
    %v21 = vld [vmem:[%s0 + $0x3] sm:$0x1]
    %23 = vset.pattern.permute.xlu0 0
    %24 = vperm.xlu0 %23, %v17
    %v25 = vpop.permute.xlu0 %24
    %28 = vst [vmem:[#allocation1] ss:$9 sm:$0xff] %v18
    %v29 = vld [vmem:[#allocation1] sm:$0xff]
    %32 = vst [vmem:[#allocation1] ss:$9 sm:$0xff] %v19
    %v33 = vld [vmem:[#allocation1] sm:$0xff]
    %36 = vst [vmem:[#allocation1] ss:$9 sm:$0xff] %v20
    %v37 = vld [vmem:[#allocation1] sm:$0xff]
    %40 = vst [vmem:[#allocation1] ss:$9 sm:$0xff] %v21
    %v41 = vld [vmem:[#allocation1] sm:$0xff]
    %v43 = vunpack.c.l.b16 %v29
    %v44 = vunpack.c.l.b16 %v33
    %v45 = vunpack.c.l.b16 %v37
    %v46 = vunpack.c.l.b16 %v41
    %v47 = vrot.slane %v44, 7
    %vm48 = vcmask 1041409
    %v49 = vsel %vm48, %v47, %v43
    %v50 = vrot.slane %v45, 6
    %vm51 = vcmask 1042434
    %v52 = vsel %vm51, %v50, %v49
    %v53 = vrot.slane %v46, 5
    %vm54 = vcmask 1043459
    %v55 = vsel %vm54, %v53, %v52
    %v56 = vpack.c.b16 %v55, %v55
    %vm57 = vcmask 31744
    %v59 = vsel %vm57, %v16, 0
    %vm61 = vcmask 1041408
    %v63 = vsel %vm61, %v56, 0
    %65 = vmatpush.bf16.msra.mxu0 0
    %66 = vmatpush.bf16.msra.mxu0 0
    %67 = vmatpush.bf16.msra.mxu0 0
    %68 = vmatpush.bf16.msra.mxu0 0
    %69 = vmatpush.bf16.msra.mxu0 0
    %70 = vmatpush.bf16.msra.mxu0 0
    %71 = vmatpush.bf16.msra.mxu0 0
    %72 = vmatpush.bf16.msra.mxu0 %v63
    %73 = vmatmul.bf16.gmra.mxu0 %v59
    %v74 = vpop.f32.mrf.mxu0
    %v75 = vadd.f32 %v25, %v74
    %v76 = vpop.f32.mrf.mxu0
    %77 = vdwg.mxu0
    %v78 = vxor.u32 %v75, 2147483648
    %v79 = vmul.f32 %v78, 1.442695
    %v80 = vpow.pop %v79
    %v81 = vadd.f32 %v80, 1.0
    %v82 = vrcp.pop %v81
    %v83 = vmul.f32 %v81, %v82
    %v84 = vsub.f32 1.0, %v83
    %v85 = vmul.f32 %v82, %v84
    %v86 = vadd.f32 %v82, %v85
    %vm87 = vweird.f32 %v81
    %vm88 = vweird.f32 %v82
    %vm89 = vmor %vm87, %vm88
    %v90 = vsel %vm89, %v82, %v86
    %v91 = vand.u32 2147483647, %v81
    %vm92 = vcmp.eq.f32.partialorder %v91, 8.507059e+37
    %v93 = vand.u32 %v81, 2147483648
    %v94 = vor.u32 1.1754944e-38, %v93
    %v95 = vsel %vm92, %v94, %v90
    %v96 = vmul.f32 1.0, %v95
    %v98 = vrot.slane %v96, 4
    %v100 = vmul.f32 %v75, %v98
    %vm101 = vcmask 125952
    %102 = vst.msk [vmem:[#allocation2] sm:$0xf] %vm101, %v100
    %103 = vst [vmem:[#allocation1] ss:$9 sm:$0xff] %v18
    %v104 = vld [vmem:[#allocation1] sm:$0xff]
    %106 = vst [vmem:[#allocation1] ss:$9 sm:$0xff] %v19
    %v107 = vld [vmem:[#allocation1] sm:$0xff]
    %109 = vst [vmem:[#allocation1] ss:$9 sm:$0xff] %v20
    %v110 = vld [vmem:[#allocation1] sm:$0xff]
    %112 = vst [vmem:[#allocation1] ss:$9 sm:$0xff] %v21
    %v113 = vld [vmem:[#allocation1] sm:$0xff]
    %v115 = vunpack.c.l.b16 %v104
    %v116 = vunpack.c.l.b16 %v107
    %v117 = vunpack.c.l.b16 %v110
    %v118 = vunpack.c.l.b16 %v113
    %v119 = vrot.slane %v115, 1
    %v120 = vsel %vm48, %v116, %v119
    %v121 = vrot.slane %v117, 7
    %v122 = vsel %vm51, %v121, %v120
    %v123 = vrot.slane %v118, 6
    %v124 = vsel %vm54, %v123, %v122
    %v125 = vpack.c.b16 %v124, %v124
    %v127 = vsel %vm61, %v125, 0
    %129 = vmatpush.bf16.msra.mxu0 0
    %130 = vmatpush.bf16.msra.mxu0 0
    %131 = vmatpush.bf16.msra.mxu0 0
    %132 = vmatpush.bf16.msra.mxu0 0
    %133 = vmatpush.bf16.msra.mxu0 0
    %134 = vmatpush.bf16.msra.mxu0 0
    %135 = vmatpush.bf16.msra.mxu0 0
    %136 = vmatpush.bf16.msra.mxu0 %v127
    %137 = vmatmul.bf16.gmra.mxu0 %v59
    %v138 = vpop.f32.mrf.mxu0
    %v139 = vadd.f32 %v25, %v138
    %v140 = vpop.f32.mrf.mxu0
    %141 = vdwg.mxu0
    %v142 = vxor.u32 %v139, 2147483648
    %v143 = vmul.f32 %v142, 1.442695
    %v144 = vpow.pop %v143
    %v145 = vadd.f32 %v144, 1.0
    %v146 = vrcp.pop %v145
    %v147 = vmul.f32 %v145, %v146
    %v148 = vsub.f32 1.0, %v147
    %v149 = vmul.f32 %v146, %v148
    %v150 = vadd.f32 %v146, %v149
    %vm151 = vweird.f32 %v145
    %vm152 = vweird.f32 %v146
    %vm153 = vmor %vm151, %vm152
    %v154 = vsel %vm153, %v146, %v150
    %v155 = vand.u32 2147483647, %v145
    %vm156 = vcmp.eq.f32.partialorder %v155, 8.507059e+37
    %v157 = vand.u32 %v145, 2147483648
    %v158 = vor.u32 1.1754944e-38, %v157
    %v159 = vsel %vm156, %v158, %v154
    %v160 = vmul.f32 1.0, %v159
    %v162 = vrot.slane %v160, 4
    %v164 = vmul.f32 %v139, %v162
    %s165 = scalar_lea.vmem [#allocation2], 4
    %166 = vst.msk [vmem:[%s165] sm:$0xf] %vm101, %v164
    // Predicated region
    $region14: #{s4d_forward.3} parent=1 // pred_check
      _
    $region15: #{s4d_forward.3} parent=1 // pred_check_branch
      %168 = sbr.rel (0) target = $region17
    $region16: #{s4d_forward.3} parent=1 // pred_region
      %170 = vsyncadd [#allocation3], 0
      %s171 = sshll.u32 [#allocation2], 4
      %s172 = int_to_ptr.vmem [resolvable:$true] %s171
      %s173 = sshll.u32 %s3, 4
      %s174 = int_to_ptr.hbm [resolvable:$true] %s173
      %179 = dma.vmem_to_hbm [thread:$0]  %s172, 128, %s174, [#allocation3], 64, 64, 4
    $region17: #{s4d_forward.3} parent=1 // pred_fallthru
      _
    // Predicated region
    $region18: #{s4d_forward.3} parent=1 // pred_check
      _
    $region19: #{s4d_forward.3} parent=1 // pred_check_branch
      %181 = sbr.rel (0) target = $region21
    $region20: #{s4d_forward.3} parent=1 // pred_region
      %183 = dma.done [#allocation3], 128
    $region21: #{s4d_forward.3} parent=1 // pred_fallthru
      _
    %184 = vsyncpa [#allocation3], 1

// kernel: s4d_forward.2
$region0: #{s4d_forward.2}
  #allocation0 [shape = 'u32[]', space=smem, size = 0x4, offset = 0x4, fixed_abs, tag = 'smem constant byte address 0x4 - core index']
  #allocation1 [shape = 'u32[72,128]{1,0:T(1,128)}', space=vmem, size = 0x9000, scoped, tag = 'internal scratch']
  #allocation2 [shape = 'f32[2,16]{1,0:T(2,128)}', space=vmem, size = 0x400, scoped, tag = 'scratch operand']
  #allocation3 [shape = 's32[1]{0}', space=sflag, size = 0x4, scoped, tag = 'scoped memory for s4d_forward.2']
  #allocation4 [shape = 's32[1]{0:T(128)S(6)}', space=smem, size = 0x200, scoped, tag = 'prefetched SMEM operand 0']
  #allocation5 [shape = 's32[1]{0:T(128)S(6)}', space=smem, size = 0x200, scoped, tag = 'prefetched SMEM operand 1']
  %s0 = inlined_call_operand.<no memory space> [shape: s32[1], index: 0, kind: input, shape index: {}, may-alias: {0,1}]
  %s1 = inlined_call_operand.<no memory space> [shape: s32[1], index: 1, kind: input, shape index: {}, may-alias: {0,1}]
  %s2 = inlined_call_operand.vmem [shape: bf16[4,2,16], index: 2, kind: input, shape index: {}]
  %s3 = inlined_call_operand.vmem [shape: bf16[4,1,16,16], index: 3, kind: input, shape index: {}]
  %s4 = inlined_call_operand.vmem [shape: f32[4], index: 4, kind: input, shape index: {}]
  %s5 = inlined_call_operand.vmem [shape: bf16[4,2,16], index: 5, kind: output, shape index: {}]
  %s6 = sld [smem:[#allocation0]]
  $region57: #{s4d_forward.2} parent=0
    _
  %s8 = ssub.s32 1, %s6
  %s9 = scalar_select 0, %s8, %s6
  %10 = sst [smem:[#allocation4]] %s0
  %11 = sst [smem:[#allocation5]] %s1
  $region1: #{s4d_forward.2} parent=0
    #allocation6 [shape = 'u8[512]{0}', space=smem, size = 0x200, scoped, tag = 'input window, operand 4, single buffered']
    #allocation7 [shape = 's32[2]{0}', space=sflag, size = 0x8, scoped, tag = 'scoped memory for s4d_forward.2']
    %12 = vsyncpa [#allocation7], 0
    loop: start=0, step=1, limit=6
    $region2: #{s4d_forward.2} parent=1 // loop_pre_header
      _
    $region3: #{s4d_forward.2} parent=1 // loop_header
      %s14 = sphi 0, %s18
      %p15 = scmp.ge.s32.totalorder %s14, 6
      %s21 = sphi 0, %s40
      %s22 = sphi 0, %s36
      %s23 = sphi 0, %s32
      %s24 = sphi 0, %s21
      %s25 = sphi 0, %s22
      %s26 = sphi 0, %s23
      %s27 = sphi 0, %s24
      %s28 = sphi 0, %s25
      %s29 = sphi 0, %s26
      %s49 = sphi 0, %s51
      %s52 = sphi 0, %s49
      %s53 = sphi 0, %s52
      %s69 = sphi 0, %s53
      %s83 = sphi 0, %s85
      %s86 = sphi 0, %s83
      %s87 = sphi 0, %s86
      %s103 = sphi 0, %s87
      %s107 = sphi 0, %s107
      %s109 = sphi 0, %s107
      %s110 = sphi 0, %s109
      %s124 = sphi 0, %s110
      %s136 = sphi 0, %s138
      %s139 = sphi 0, %s136
      %s140 = sphi 0, %s139
      %s156 = sphi 0, %s140
    $region4: #{s4d_forward.2} parent=1 // loop_header_branch
      %17 = sbr.rel (%p15) target = $region8
    $region5: #{s4d_forward.2} parent=1 // loop_body
      %s19 = ssub.s32 %s14, 1
      %s20 = ssub.s32 %s14, 2
      %s30 = sadd.s32 1, %s23
      %p31 = scmp.ge.s32.totalorder %s30, 1
      %s32 = scalar_select %p31, 0, %s30
      %s33 = sadd.s32 1, %s22
      %s34 = scalar_select %p31, %s33, %s22
      %p35 = scmp.ge.s32.totalorder %s34, 1
      %s36 = scalar_select %p35, 0, %s34
      %s37 = sadd.s32 1, %s21
      %s38 = scalar_select %p35, %s37, %s21
      %p39 = scmp.ge.s32.totalorder %s38, 4
      %s40 = scalar_select %p39, 0, %s38
      %s41 = sld [smem:[#allocation5 + %s23]]
      %s42 = sld [smem:[#allocation5 + %s32]]
      %s43 = ssub.s32 %s21, %s40
      %s44 = ssub.s32 %s22, %s36
      %s45 = sor.u32 %s43, %s44
      %s46 = ssub.s32 %s41, %s42
      %s47 = sor.u32 %s45, %s46
      %p48 = scmp.eq.s32.totalorder %s47, 0
      %s50 = sadd.s32 %s49, 1
      %s51 = scalar_select %p48, %s49, %s50
      %p54 = pneg %p48
      %p55 = scmp.eq.s32.totalorder %s14, 3
      %p56 = por %p54, %p55
      %p57 = scmp.ne.s32.totalorder %s49, %s52
      %p58 = scmp.eq.s32.totalorder %s14, 0
      %p59 = por %p57, %p58
      %p60 = scmp.ne.s32.totalorder %s49, %s52
      %p61 = scmp.eq.s32.totalorder %s19, 3
      %p62 = por %p60, %p61
      %p63 = scmp.ne.s32.totalorder %s52, %s53
      %p64 = scmp.eq.s32.totalorder %s19, 0
      %p65 = por %p63, %p64
      %p66 = scmp.ne.s32.totalorder %s52, %s53
      %p67 = scmp.eq.s32.totalorder %s20, 3
      %p68 = por %p66, %p67
      %p70 = scmp.ne.s32.totalorder %s53, %s69
      %p71 = scmp.eq.s32.totalorder %s20, 0
      %p72 = por %p70, %p71
      %s73 = sld [smem:[#allocation4 + %s23]]
      %s74 = sld [smem:[#allocation5 + %s23]]
      %s75 = ssub.s32 %s73, %s74
      %s76 = sld [smem:[#allocation4 + %s32]]
      %s77 = sld [smem:[#allocation5 + %s32]]
      %s78 = ssub.s32 %s76, %s77
      %s79 = ssub.s32 %s21, %s40
      %s80 = ssub.s32 %s75, %s78
      %s81 = sor.u32 %s79, %s80
      %p82 = scmp.eq.s32.totalorder %s81, 0
      %s84 = sadd.s32 %s83, 1
      %s85 = scalar_select %p82, %s83, %s84
      %p88 = pneg %p82
      %p89 = scmp.eq.s32.totalorder %s14, 3
      %p90 = por %p88, %p89
      %p91 = scmp.ne.s32.totalorder %s83, %s86
      %p92 = scmp.eq.s32.totalorder %s14, 0
      %p93 = por %p91, %p92
      %p94 = scmp.ne.s32.totalorder %s83, %s86
      %p95 = scmp.eq.s32.totalorder %s19, 3
      %p96 = por %p94, %p95
      %p97 = scmp.ne.s32.totalorder %s86, %s87
      %p98 = scmp.eq.s32.totalorder %s19, 0
      %p99 = por %p97, %p98
      %p100 = scmp.ne.s32.totalorder %s86, %s87
      %p101 = scmp.eq.s32.totalorder %s20, 3
      %p102 = por %p100, %p101
      %p104 = scmp.ne.s32.totalorder %s87, %s103
      %p105 = scmp.eq.s32.totalorder %s20, 0
      %p106 = por %p104, %p105
      %s108 = sadd.s32 %s107, 1
      %p111 = scmp.eq.s32.totalorder %s14, 3
      %p112 = scmp.ne.s32.totalorder %s107, %s109
      %p113 = scmp.eq.s32.totalorder %s14, 0
      %p114 = por %p112, %p113
      %p115 = scmp.ne.s32.totalorder %s107, %s109
      %p116 = scmp.eq.s32.totalorder %s19, 3
      %p117 = por %p115, %p116
      %p118 = scmp.ne.s32.totalorder %s109, %s110
      %p119 = scmp.eq.s32.totalorder %s19, 0
      %p120 = por %p118, %p119
      %p121 = scmp.ne.s32.totalorder %s109, %s110
      %p122 = scmp.eq.s32.totalorder %s20, 3
      %p123 = por %p121, %p122
      %p125 = scmp.ne.s32.totalorder %s110, %s124
      %p126 = scmp.eq.s32.totalorder %s20, 0
      %p127 = por %p125, %p126
      %s128 = sld [smem:[#allocation4 + %s23]]
      %s129 = sld [smem:[#allocation4 + %s32]]
      %s130 = ssub.s32 %s21, %s40
      %s131 = ssub.s32 %s22, %s36
      %s132 = sor.u32 %s130, %s131
      %s133 = ssub.s32 %s128, %s129
      %s134 = sor.u32 %s132, %s133
      %p135 = scmp.eq.s32.totalorder %s134, 0
      %s137 = sadd.s32 %s136, 1
      %s138 = scalar_select %p135, %s136, %s137
      %p141 = pneg %p135
      %p142 = scmp.eq.s32.totalorder %s14, 3
      %p143 = por %p141, %p142
      %p144 = scmp.ne.s32.totalorder %s136, %s139
      %p145 = scmp.eq.s32.totalorder %s14, 0
      %p146 = por %p144, %p145
      %p147 = scmp.ne.s32.totalorder %s136, %s139
      %p148 = scmp.eq.s32.totalorder %s19, 3
      %p149 = por %p147, %p148
      %p150 = scmp.ne.s32.totalorder %s139, %s140
      %p151 = scmp.eq.s32.totalorder %s19, 0
      %p152 = por %p150, %p151
      %p153 = scmp.ne.s32.totalorder %s139, %s140
      %p154 = scmp.eq.s32.totalorder %s20, 3
      %p155 = por %p153, %p154
      %p157 = scmp.ne.s32.totalorder %s140, %s156
      %p158 = scmp.eq.s32.totalorder %s20, 0
      %p159 = por %p157, %p158
      %p160 = scmp.le.s32.totalorder 1, %s14
      %p161 = scmp.lt.s32.totalorder %s14, 5
      %p162 = pnand %p160, %p161
      %p163 = pneg %p162
      // Predicated region
      $region9: #{s4d_forward.2} parent=5 // pred_check
        _
      $region10: #{s4d_forward.2} parent=5 // pred_check_branch
        %165 = sbr.rel (%p162) target = $region12
      $region11: #{s4d_forward.2} parent=5 // pred_region
        %s166 = ssub.s32 %s14, 1
        // Predicated region
        $region13: #{s4d_forward.2} parent=11 // pred_check
          %p167 = pneg %p120
        $region14: #{s4d_forward.2} parent=11 // pred_check_branch
          %169 = sbr.rel (%p167) target = $region16
        $region15: #{s4d_forward.2} parent=11 // pred_region
          %171 = vsyncadd [#allocation7], 0
          %s173 = sshll.u32 %s4, 4
          %s174 = int_to_ptr.vmem [resolvable:$true] %s173
          %176 = dma.vmem_to_smem %s174, 16, [#allocation6], [#allocation7]
        $region16: #{s4d_forward.2} parent=11 // pred_fallthru
          _
      $region12: #{s4d_forward.2} parent=5 // pred_fallthru
        _
      %p177 = scmp.lt.s32.totalorder %s14, 4
      // Predicated region
      $region17: #{s4d_forward.2} parent=5 // pred_check
        %p178 = pneg %p177
      $region18: #{s4d_forward.2} parent=5 // pred_check_branch
        %180 = sbr.rel (%p178) target = $region20
      $region19: #{s4d_forward.2} parent=5 // pred_region
        // Predicated region
        $region21: #{s4d_forward.2} parent=19 // pred_check
          %p181 = pneg %p59
        $region22: #{s4d_forward.2} parent=19 // pred_check_branch
          %183 = sbr.rel (%p181) target = $region24
        $region23: #{s4d_forward.2} parent=19 // pred_region
          %s184 = sld [smem:[#allocation5 + %s23]]
          %p185 = scmp.lt.s32.totalorder %s21, 3
          %s186 = scalar_select %p185, %s21, 3
          %p187 = scmp.lt.s32.totalorder %s22, 0
          %s188 = scalar_select %p187, %s22, 0
          %p189 = scmp.lt.s32.totalorder %s184, 0
          %s190 = scalar_select %p189, %s184, 0
          %s191 = sadd.s32 %s190, %s188
          %s192 = sadd.s32 %s191, %s186
          %s193 = scalar_lea.vmem %s2, %s192
          %s194 = sld [smem:[#allocation5 + %s23]]
        $region24: #{s4d_forward.2} parent=19 // pred_fallthru
          _
        // Predicated region
        $region25: #{s4d_forward.2} parent=19 // pred_check
          %p195 = pneg %p93
        $region26: #{s4d_forward.2} parent=19 // pred_check_branch
          %197 = sbr.rel (%p195) target = $region28
        $region27: #{s4d_forward.2} parent=19 // pred_region
          %s198 = sld [smem:[#allocation4 + %s23]]
          %s199 = sld [smem:[#allocation5 + %s23]]
          %s200 = ssub.s32 %s198, %s199
          %p201 = scmp.lt.s32.totalorder %s21, 3
          %s202 = scalar_select %p201, %s21, 3
          %p203 = scmp.lt.s32.totalorder %s200, 0
          %s204 = scalar_select %p203, %s200, 0
          %s205 = smul.addr %s204, 2
          %s206 = smul.addr %s202, 2
          %s207 = sadd.s32 %s205, %s206
          %s208 = smul.addr %s207, 4
          %s209 = scalar_lea.vmem %s3, %s208
          %s210 = sld [smem:[#allocation4 + %s23]]
          %s211 = sld [smem:[#allocation5 + %s23]]
          %s212 = ssub.s32 %s210, %s211
        $region28: #{s4d_forward.2} parent=19 // pred_fallthru
          _
      $region20: #{s4d_forward.2} parent=5 // pred_fallthru
        _
      %p213 = scmp.le.s32.totalorder 1, %s14
      %p214 = scmp.lt.s32.totalorder %s14, 5
      %p215 = pnand %p213, %p214
      %p216 = pneg %p215
      // Predicated region
      $region29: #{s4d_forward.2} parent=5 // pred_check
        _
      $region30: #{s4d_forward.2} parent=5 // pred_check_branch
        %218 = sbr.rel (%p215) target = $region32
      $region31: #{s4d_forward.2} parent=5 // pred_region
        %s219 = ssub.s32 %s14, 1
        // Predicated region
        $region33: #{s4d_forward.2} parent=31 // pred_check
          %p220 = pneg %p120
        $region34: #{s4d_forward.2} parent=31 // pred_check_branch
          %222 = sbr.rel (%p220) target = $region36
        $region35: #{s4d_forward.2} parent=31 // pred_region
          %224 = dma.done [#allocation7], 16
        $region36: #{s4d_forward.2} parent=31 // pred_fallthru
          _
        %225 = sfence
        %s226 = sld [smem:[#allocation5 + %s26]]
        %p227 = scmp.lt.s32.totalorder %s24, 3
        %s228 = scalar_select %p227, %s24, 3
        %p229 = scmp.lt.s32.totalorder %s25, 0
        %s230 = scalar_select %p229, %s25, 0
        %p231 = scmp.lt.s32.totalorder %s226, 0
        %s232 = scalar_select %p231, %s226, 0
        %s233 = sadd.s32 %s232, %s230
        %s234 = sadd.s32 %s233, %s228
        %s235 = scalar_lea.vmem %s2, %s234
        %p236 = pneg %p65
        %p237 = pneg %p62
        %s238 = sld [smem:[#allocation4 + %s26]]
        %s239 = sld [smem:[#allocation5 + %s26]]
        %s240 = ssub.s32 %s238, %s239
        %p241 = scmp.lt.s32.totalorder %s24, 3
        %s242 = scalar_select %p241, %s24, 3
        %p243 = scmp.lt.s32.totalorder %s240, 0
        %s244 = scalar_select %p243, %s240, 0
        %s245 = smul.addr %s244, 2
        %s246 = smul.addr %s242, 2
        %s247 = sadd.s32 %s245, %s246
        %s248 = smul.addr %s247, 4
        %s249 = scalar_lea.vmem %s3, %s248
        %p250 = pneg %p99
        %p251 = pneg %p96
        %p252 = pneg %p120
        %p253 = pneg %p117
        %p254 = pneg %p152
        %p255 = pneg %p149
        %s256 = sld [smem:[#allocation4 + %s26]]
        %p257 = scmp.lt.s32.totalorder %s24, 3
        %s258 = scalar_select %p257, %s24, 3
        %p259 = scmp.lt.s32.totalorder %s25, 0
        %s260 = scalar_select %p259, %s25, 0
        %p261 = scmp.lt.s32.totalorder %s256, 0
        %s262 = scalar_select %p261, %s256, 0
        %s263 = sadd.s32 %s262, %s260
        %s264 = sadd.s32 %s263, %s258
        %s265 = scalar_lea.vmem %s5, %s264
        %s266 = sld [smem:[#allocation5 + %s26]]
        %p267 = scmp.lt.s32.totalorder %s24, 3
        %s268 = scalar_select %p267, %s24, 3
        %p269 = scmp.lt.s32.totalorder %s25, 0
        %s270 = scalar_select %p269, %s25, 0
        %p271 = scmp.lt.s32.totalorder %s266, 0
        %s272 = scalar_select %p271, %s266, 0
        %s273 = sadd.s32 %s272, %s270
        %s274 = sadd.s32 %s273, %s268
        %s275 = scalar_lea.vmem %s2, %s274
        %s276 = sld [smem:[#allocation5 + %s26]]
        %s277 = sld [smem:[#allocation4 + %s26]]
        %s278 = sld [smem:[#allocation5 + %s26]]
        %s279 = ssub.s32 %s277, %s278
        %p280 = scmp.lt.s32.totalorder %s24, 3
        %s281 = scalar_select %p280, %s24, 3
        %p282 = scmp.lt.s32.totalorder %s279, 0
        %s283 = scalar_select %p282, %s279, 0
        %s284 = smul.addr %s283, 2
        %s285 = smul.addr %s281, 2
        %s286 = sadd.s32 %s284, %s285
        %s287 = smul.addr %s286, 4
        %s288 = scalar_lea.vmem %s3, %s287
        %s289 = sld [smem:[#allocation4 + %s26]]
        %s290 = sld [smem:[#allocation5 + %s26]]
        %s291 = ssub.s32 %s289, %s290
        %s292 = sld [smem:[#allocation4 + %s26]]
        %p293 = scmp.lt.s32.totalorder %s24, 3
        %s294 = scalar_select %p293, %s24, 3
        %p295 = scmp.lt.s32.totalorder %s25, 0
        %s296 = scalar_select %p295, %s25, 0
        %p297 = scmp.lt.s32.totalorder %s292, 0
        %s298 = scalar_select %p297, %s292, 0
        %s299 = sadd.s32 %s298, %s296
        %s300 = sadd.s32 %s299, %s294
        %s301 = scalar_lea.vmem %s5, %s300
        %s302 = sld [smem:[#allocation4 + %s26]]
        %s304 = sld [smem:[#allocation5 + %s26]]
        %s305 = sld [smem:[#allocation4 + %s26]]
        %p306 = scmp.eq.s32.totalorder %s304, 0
        // Predicated region
        $region37: #{s4d_forward.2} parent=31 // pred_check
          %p307 = pneg %p306
        $region38: #{s4d_forward.2} parent=31 // pred_check_branch
          %309 = sbr.rel (%p307) target = $region40
        $region39: #{s4d_forward.2} parent=31 // pred_region
          %vm310 = vcmask 123904
          %311 = vst.msk [vmem:[#allocation2] sm:$0x3] %vm310, 0.0
        $region40: #{s4d_forward.2} parent=31 // pred_fallthru
          _
        %v312 = vld [vmem:[#allocation2] sm:$0x3]
        %v313 = vld [vmem:[%s275] sm:$0x1]
        %v314 = vld [vmem:[%s288] sm:$0xf]
        %v315 = vld [vmem:[%s288 + $0x4] sm:$0xf]
        %v318 = vunpack.c.l.b16 %v314
        %v319 = vunpack.c.l.b16 %v315
        %v320 = vpack.c.b16 %v319, %v318
        %vm322 = vcmask 130048
        %v324 = vsel %vm322, %v313, 0
        %326 = vmatpush.bf16.msra.mxu0 0
        %327 = vmatpush.bf16.msra.mxu0 0
        %328 = vmatpush.bf16.msra.mxu0 0
        %329 = vmatpush.bf16.msra.mxu0 0
        %330 = vmatpush.bf16.msra.mxu0 0
        %331 = vmatpush.bf16.msra.mxu0 0
        %332 = vmatpush.bf16.msra.mxu0 0
        %333 = vmatpush.bf16.msra.mxu0 %v320
        %334 = vmatmul.bf16.gmra.mxu0 %v324
        %v335 = vpop.f32.mrf.mxu0
        %v336 = vadd.f32 0.0, %v335
        %v337 = vpop.f32.mrf.mxu0
        %338 = vdwg.mxu0
        %v339 = vadd.f32 %v312, %v336
        %vm340 = vcmask 123904
        %341 = vst.msk [vmem:[#allocation2] sm:$0x3] %vm340, %v339
        %p342 = scmp.eq.s32.totalorder %s304, %s305
        // Predicated region
        $region41: #{s4d_forward.2} parent=31 // pred_check
          %p343 = pneg %p342
        $region42: #{s4d_forward.2} parent=31 // pred_check_branch
          %345 = sbr.rel (%p343) target = $region44
        $region43: #{s4d_forward.2} parent=31 // pred_region
          %v346 = vld [vmem:[#allocation2] sm:$0x3]
          %v347 = vld [vmem:[%s275] sm:$0x1]
          %v348 = vunpack.c.l.bf16 %v347
          %s349 = sld [smem:[#allocation6 + %s24]]
          %v350 = vstv %s349
          %v351 = vmul.f32 %v348, %v350
          %v352 = vadd.f32 %v346, %v351
          %v353 = vmul.f32 %v352, 0.5
          %v354 = vmul.f32 %v352, 0.70710677
          %v355 = vmul.f32 %v354, %v354
          %v356 = vmin.f32 16.0, %v355
          %v357 = vmul.f32 %v356, 2.1237322e-06
          %v358 = vadd.f32 %v357, 0.00028619796
          %v359 = vmul.f32 %v356, %v358
          %v360 = vadd.f32 %v359, 0.0036580483
          %v361 = vmul.f32 %v356, %v360
          %v362 = vadd.f32 %v361, 0.05243302
          %v363 = vmul.f32 %v356, %v362
          %v364 = vadd.f32 %v363, 0.18741608
          %v365 = vmul.f32 %v356, %v364
          %v366 = vadd.f32 %v365, 1.1283791
          %v367 = vmul.f32 %v354, %v366
          %v368 = vmul.f32 %v356, 3.8918573e-05
          %v369 = vadd.f32 %v368, 0.001143296
          %v370 = vmul.f32 %v356, %v369
          %v371 = vadd.f32 %v370, 0.014752088
          %v372 = vmul.f32 %v356, %v371
          %v373 = vadd.f32 %v372, 0.112945676
          %v374 = vmul.f32 %v356, %v373
          %v375 = vadd.f32 %v374, 0.4994258
          %v376 = vmul.f32 %v356, %v375
          %v377 = vadd.f32 %v376, 1.0
          %v378 = vrcp.pop %v377
          %v379 = vmul.f32 %v377, %v378
          %v380 = vsub.f32 1.0, %v379
          %v381 = vmul.f32 %v378, %v380
          %v382 = vadd.f32 %v378, %v381
          %vm383 = vweird.f32 %v377
          %vm384 = vweird.f32 %v378
          %vm385 = vmor %vm383, %vm384
          %v386 = vsel %vm385, %v378, %v382
          %v387 = vand.u32 2147483647, %v377
          %vm388 = vcmp.eq.f32.partialorder %v387, 8.507059e+37
          %v389 = vand.u32 %v377, 2147483648
          %v390 = vor.u32 1.1754944e-38, %v389
          %v391 = vsel %vm388, %v390, %v386
          %v392 = vmul.f32 %v367, %v391
          %v393 = vmin.f32 %v392, 1.0
          %v394 = vmax.f32 %v393, -1.0
          %v395 = vadd.f32 %v394, 1.0
          %v396 = vmul.f32 %v353, %v395
          %v397 = vpack.c.bf16 %v396, %v396
          %vm398 = vcmask 122880
          %399 = vst.msk [vmem:[%s301] sm:$0x1] %vm398, %v397
        $region44: #{s4d_forward.2} parent=31 // pred_fallthru
          _
        %s400 = sld [smem:[#allocation4 + %s26]]
        %p401 = scmp.lt.s32.totalorder %s24, 3
        %s402 = scalar_select %p401, %s24, 3
        %p403 = scmp.lt.s32.totalorder %s25, 0
        %s404 = scalar_select %p403, %s25, 0
        %p405 = scmp.lt.s32.totalorder %s400, 0
        %s406 = scalar_select %p405, %s400, 0
        %s407 = sadd.s32 %s406, %s404
        %s408 = sadd.s32 %s407, %s402
        %s409 = scalar_lea.vmem %s5, %s408
        // Predicated region
        $region45: #{s4d_forward.2} parent=31 // pred_check
          %p410 = pneg %p149
        $region46: #{s4d_forward.2} parent=31 // pred_check_branch
          %412 = sbr.rel (%p410) target = $region48
        $region47: #{s4d_forward.2} parent=31 // pred_region
          %s413 = sld [smem:[#allocation4 + %s26]]
        $region48: #{s4d_forward.2} parent=31 // pred_fallthru
          _
      $region32: #{s4d_forward.2} parent=5 // pred_fallthru
        _
      %p414 = scmp.le.s32.totalorder 2, %s14
      // Predicated region
      $region49: #{s4d_forward.2} parent=5 // pred_check
        %p415 = pneg %p414
      $region50: #{s4d_forward.2} parent=5 // pred_check_branch
        %417 = sbr.rel (%p415) target = $region52
      $region51: #{s4d_forward.2} parent=5 // pred_region
        %s418 = ssub.s32 %s14, 2
        // Predicated region
        $region53: #{s4d_forward.2} parent=51 // pred_check
          %p419 = pneg %p155
        $region54: #{s4d_forward.2} parent=51 // pred_check_branch
          %421 = sbr.rel (%p419) target = $region56
        $region55: #{s4d_forward.2} parent=51 // pred_region
          %s422 = sld [smem:[#allocation4 + %s29]]
          %p423 = scmp.lt.s32.totalorder %s27, 3
          %s424 = scalar_select %p423, %s27, 3
          %p425 = scmp.lt.s32.totalorder %s28, 0
          %s426 = scalar_select %p425, %s28, 0
          %p427 = scmp.lt.s32.totalorder %s422, 0
          %s428 = scalar_select %p427, %s422, 0
          %s429 = sadd.s32 %s428, %s426
          %s430 = sadd.s32 %s429, %s424
          %s431 = scalar_lea.vmem %s5, %s430
        $region56: #{s4d_forward.2} parent=51 // pred_fallthru
          _
      $region52: #{s4d_forward.2} parent=5 // pred_fallthru
        _
    $region6: #{s4d_forward.2} parent=1 // loop_footer
      %s18 = sadd.s32 1, %s14
    $region7: #{s4d_forward.2} parent=1 // loop_footer_branch
      %13 = sbr.rel target = $region3
    $region8: #{s4d_forward.2} parent=1 // loop_exit
      _
    %432 = vsyncpa [#allocation7], 1
    %s433 = scalar_lea.sflag [#allocation7], 1
    %434 = vsyncpa %s433, 1

</llo_original>
